<compile_context>
chip_gen: v7x
topology: tpu7x:2x2x1
jax: 0.10.0
libtpu: 0.0.40
codegen_flags: <defaults>
</compile_context>

<pallas_src>
from functools import partial

import numpy as np
import jax
import jax.numpy as jnp
from jax import lax
from jax.experimental import pallas as pl
from jax.experimental.pallas import tpu as pltpu

VMEM_LIMIT = 48 * 1024 * 1024        # explicit scoped-VMEM limit (safe on v5e/v6e/v7x)
_SQRT_HALF = 0.7071067811865476
_LN_EPS = 1e-5


def _gelu_exact(x):
    # exact (erf) GELU, matching torch.nn.GELU default; keep in f32 (v5e has no bf16 VPU/EUP)
    return 0.5 * x * (1.0 + lax.erf(x * _SQRT_HALF))


def _pick_tile(dim, candidates):
    for c in candidates:
        if dim >= c and dim % c == 0:
            return c
    return dim                       # full extent always satisfies the (8,128) rule


# ----------------------------------------------------------------------------
# Fused (LayerNorm?) -> tiled matmul -> (+bias, +GELU, +add) kernel
# ----------------------------------------------------------------------------
def _linear_kernel(*refs, nk, has_ln, has_bias, has_add, act, eps):
    it = iter(refs)
    x_ref = next(it)
    if has_ln:
        g_ref = next(it)
        beta_ref = next(it)
    w_ref = next(it)
    b_ref = next(it) if has_bias else None
    a_ref = next(it) if has_add else None
    o_ref = next(it)
    acc_ref = next(it)

    k = pl.program_id(2)

    @pl.when(k == 0)
    def _():
        acc_ref[...] = jnp.zeros_like(acc_ref)

    x = x_ref[...].astype(jnp.float32)
    if has_ln:                       # LN prologue (requires full K tile; enforced by wrapper)
        mu = jnp.mean(x, axis=-1, keepdims=True)
        var = jnp.mean((x - mu) ** 2, axis=-1, keepdims=True)
        x = (x - mu) * lax.rsqrt(var + eps)
        x = x * g_ref[...].astype(jnp.float32) + beta_ref[...].astype(jnp.float32)

    # bf16 MXU inputs, f32 accumulation
    acc_ref[...] += jnp.dot(x.astype(jnp.bfloat16), w_ref[...],
                            preferred_element_type=jnp.float32)

    @pl.when(k == nk - 1)
    def _():
        acc = acc_ref[...]
        if has_bias:
            acc = acc + b_ref[...].astype(jnp.float32)
        if act == "gelu":
            acc = _gelu_exact(acc)
        if has_add:
            acc = acc + a_ref[...].astype(jnp.float32)
        o_ref[...] = acc.astype(o_ref.dtype)


def pallas_linear(x, w, b=None, *, ln=None, add=None, act="none"):
    """y = act(LN?(x) @ w + b) + add.   x: (..., K), w: (K, N)."""
    orig = x.shape
    K = orig[-1]
    M = int(np.prod(orig[:-1]))
    N = w.shape[1]
    x2 = x.reshape(M, K)
    w = w if w.dtype == jnp.bfloat16 else w.astype(jnp.bfloat16)

    has_ln = ln is not None
    has_bias = b is not None
    has_add = add is not None

    tm = _pick_tile(M, (512, 256, 128, 64, 32, 16, 8))
    tn = _pick_tile(N, (512, 256, 128))
    tk = K if has_ln else _pick_tile(K, (512, 256, 128))   # LN needs the full row
    gm, gn, gk = M // tm, N // tn, K // tk

    in_specs = [pl.BlockSpec((tm, tk), lambda i, j, k: (i, k))]
    args = [x2]
    if has_ln:
        g, beta = ln
        in_specs += [pl.BlockSpec((1, K), lambda i, j, k: (0, 0)),
                     pl.BlockSpec((1, K), lambda i, j, k: (0, 0))]
        args += [g.reshape(1, K).astype(jnp.float32),
                 beta.reshape(1, K).astype(jnp.float32)]
    in_specs += [pl.BlockSpec((tk, tn), lambda i, j, k: (k, j))]
    args += [w]
    if has_bias:
        in_specs += [pl.BlockSpec((1, tn), lambda i, j, k: (0, j))]
        args += [b.reshape(1, N).astype(jnp.float32)]
    if has_add:
        in_specs += [pl.BlockSpec((tm, tn), lambda i, j, k: (i, j))]
        args += [add.reshape(M, N).astype(jnp.float32)]

    out = pl.pallas_call(
        partial(_linear_kernel, nk=gk, has_ln=has_ln, has_bias=has_bias,
                has_add=has_add, act=act, eps=_LN_EPS),
        out_shape=jax.ShapeDtypeStruct((M, N), x.dtype),
        grid=(gm, gn, gk),
        in_specs=in_specs,
        out_specs=pl.BlockSpec((tm, tn), lambda i, j, k: (i, j)),
        scratch_shapes=[pltpu.VMEM((tm, tn), jnp.float32)],
        compiler_params=pltpu.CompilerParams(
            dimension_semantics=("parallel", "parallel", "arbitrary"),
            vmem_limit_bytes=VMEM_LIMIT),
    )(*args)
    return out.reshape(orig[:-1] + (N,))


# ----------------------------------------------------------------------------
# Fused attention: heads folded, per-batch grid, output-projection + residual
# fused in the epilogue -> output already lane-dense (N, C).
# qkv last-axis layout is (3, H, hd) exactly like torch's reshape(B,N,3,H,hd).
# ----------------------------------------------------------------------------
def _attn_kernel(qkv_ref, xres_ref, pw_ref, pb_ref, o_ref, *, num_heads, scale):
    qkv = qkv_ref[0].astype(jnp.float32)                 # (N, 3C)
    C = qkv.shape[-1] // 3
    hd = C // num_heads
    pw = pw_ref[...]                                     # (C, C) bf16
    # start accumulator with residual + proj bias; heads accumulate into it
    acc = xres_ref[0].astype(jnp.float32) + pb_ref[...].astype(jnp.float32)
    for h in range(num_heads):                           # unrolled at trace time
        q = qkv[:, h * hd:(h + 1) * hd]
        kk = qkv[:, C + h * hd:C + (h + 1) * hd]
        v = qkv[:, 2 * C + h * hd:2 * C + (h + 1) * hd]
        # contract the shared head-dim directly (no k.T relayout)
        s = lax.dot_general(q.astype(jnp.bfloat16), kk.astype(jnp.bfloat16),
                            (((1,), (1,)), ((), ())),
                            preferred_element_type=jnp.float32) * scale
        s = s - jnp.max(s, axis=-1, keepdims=True)
        p = jnp.exp(s)
        p = p * pl.reciprocal(jnp.sum(p, axis=-1, keepdims=True), approx=True)
        oh = jnp.dot(p.astype(jnp.bfloat16), v.astype(jnp.bfloat16),
                     preferred_element_type=jnp.float32)            # (N, hd)
        # fused output projection: o @ proj_w == sum_h oh @ proj_w[h*hd:(h+1)*hd]
        acc = acc + jnp.dot(oh.astype(jnp.bfloat16), pw[h * hd:(h + 1) * hd, :],
                            preferred_element_type=jnp.float32)     # (N, C)
    o_ref[0] = acc.astype(o_ref.dtype)


def pallas_attention_block(qkv, x_res, proj_w, proj_b, num_heads, scale):
    B, N, C3 = qkv.shape
    C = C3 // 3
    pw = proj_w if proj_w.dtype == jnp.bfloat16 else proj_w.astype(jnp.bfloat16)
    return pl.pallas_call(
        partial(_attn_kernel, num_heads=num_heads, scale=scale),
        out_shape=jax.ShapeDtypeStruct((B, N, C), x_res.dtype),
        grid=(B,),
        in_specs=[
            pl.BlockSpec((1, N, C3), lambda b: (b, 0, 0)),
            pl.BlockSpec((1, N, C), lambda b: (b, 0, 0)),
            pl.BlockSpec((C, C), lambda b: (0, 0)),
            pl.BlockSpec((1, C), lambda b: (0, 0)),
        ],
        out_specs=pl.BlockSpec((1, N, C), lambda b: (b, 0, 0)),
        compiler_params=pltpu.CompilerParams(
            dimension_semantics=("parallel",),
            vmem_limit_bytes=VMEM_LIMIT),
    )(qkv, x_res, pw, proj_b.reshape(1, C).astype(jnp.float32))


# ----------------------------------------------------------------------------
# Fused MLP: LN2 + fc1 + exact-GELU + fc2 + residual in one kernel
# (the (tokens, 4C) hidden activation stays in VMEM).
# ----------------------------------------------------------------------------
def _mlp_kernel(x_ref, g_ref, beta_ref, w1_ref, b1_ref, w2_ref, b2_ref, o_ref, *, eps):
    x = x_ref[...].astype(jnp.float32)
    mu = jnp.mean(x, axis=-1, keepdims=True)
    var = jnp.mean((x - mu) ** 2, axis=-1, keepdims=True)
    h = (x - mu) * lax.rsqrt(var + eps)
    h = h * g_ref[...].astype(jnp.float32) + beta_ref[...].astype(jnp.float32)
    h = jnp.dot(h.astype(jnp.bfloat16), w1_ref[...], preferred_element_type=jnp.float32)
    h = _gelu_exact(h + b1_ref[...].astype(jnp.float32))
    h = jnp.dot(h.astype(jnp.bfloat16), w2_ref[...], preferred_element_type=jnp.float32)
    h = h + b2_ref[...].astype(jnp.float32)
    o_ref[...] = (x + h).astype(o_ref.dtype)


def pallas_mlp_block(x, ln_g, ln_b, w1, b1, w2, b2):
    B, N, C = x.shape
    M = B * N
    Hd = w1.shape[1]
    x2 = x.reshape(M, C)
    w1 = w1 if w1.dtype == jnp.bfloat16 else w1.astype(jnp.bfloat16)
    w2 = w2 if w2.dtype == jnp.bfloat16 else w2.astype(jnp.bfloat16)
    tm = _pick_tile(M, (512, 256, 128, 64, 32, 16, 8))
    out = pl.pallas_call(
        partial(_mlp_kernel, eps=_LN_EPS),
        out_shape=jax.ShapeDtypeStruct((M, C), x.dtype),
        grid=(M // tm,),
        in_specs=[
            pl.BlockSpec((tm, C), lambda i: (i, 0)),
            pl.BlockSpec((1, C), lambda i: (0, 0)),
            pl.BlockSpec((1, C), lambda i: (0, 0)),
            pl.BlockSpec((C, Hd), lambda i: (0, 0)),
            pl.BlockSpec((1, Hd), lambda i: (0, 0)),
            pl.BlockSpec((Hd, C), lambda i: (0, 0)),
            pl.BlockSpec((1, C), lambda i: (0, 0)),
        ],
        out_specs=pl.BlockSpec((tm, C), lambda i: (i, 0)),
        compiler_params=pltpu.CompilerParams(
            dimension_semantics=("parallel",),
            vmem_limit_bytes=VMEM_LIMIT),
    )(x2, ln_g.reshape(1, C).astype(jnp.float32), ln_b.reshape(1, C).astype(jnp.float32),
      w1, b1.reshape(1, Hd).astype(jnp.float32), w2, b2.reshape(1, C).astype(jnp.float32))
    return out.reshape(B, N, C)


# ----------------------------------------------------------------------------
# Transformer block: 3 fused pallas_calls (LN1+QKV, attn+proj+res, LN2+MLP+res)
# ----------------------------------------------------------------------------
def block_forward(x, p, num_heads):
    B, N, C = x.shape
    scale = float(C // num_heads) ** -0.5
    qkv = pallas_linear(x, p["qkv_w"], None, ln=(p["ln1_g"], p["ln1_b"]))   # qkv_bias=False
    x = pallas_attention_block(qkv, x, p["proj_w"], p["proj_b"], num_heads, scale)
    x = pallas_mlp_block(x, p["ln2_g"], p["ln2_b"],
                         p["fc1_w"], p["fc1_b"], p["fc2_w"], p["fc2_b"])
    return x


# ----------------------------------------------------------------------------
# Helpers: patch extraction (Conv3d with stride == kernel) and sinusoid table
# ----------------------------------------------------------------------------
def patchify(x, ps, ts):
    # x: (B, C, T, H, W) -> (B, N, C*ts*ps*ps), patch vector order (C, t, h, w)
    B, C, T, H, W = x.shape
    x = x.reshape(B, C, T // ts, ts, H // ps, ps, W // ps, ps)
    x = jnp.transpose(x, (0, 2, 4, 6, 1, 3, 5, 7))
    return x.reshape(B, (T // ts) * (H // ps) * (W // ps), C * ts * ps * ps)


def get_sinusoid_encoding_table(n_position, d_hid):
    pos = np.arange(n_position)[:, None].astype(np.float64)
    hid = np.arange(d_hid)[None, :]
    angle = pos / np.power(10000, 2 * (hid // 2) / d_hid)
    table = np.zeros((n_position, d_hid), dtype=np.float32)
    table[:, 0::2] = np.sin(angle[:, 0::2])
    table[:, 1::2] = np.cos(angle[:, 1::2])
    return jnp.asarray(table)[None]     # (1, N, d)


# ----------------------------------------------------------------------------
# Parameter init (xavier weights -> stored bf16 for the MXU, f32 elsewhere)
# ----------------------------------------------------------------------------
def _xavier(key, shape):
    fan_in, fan_out = shape[0], shape[1]
    limit = float(np.sqrt(6.0 / (fan_in + fan_out)))
    return jax.random.uniform(key, shape, jnp.float32, -limit, limit)


def _xavier_bf16(key, shape):
    return _xavier(key, shape).astype(jnp.bfloat16)


def _make_block(key, dim, mlp_ratio):
    hidden = int(dim * mlp_ratio)
    ks = jax.random.split(key, 4)
    return dict(
        ln1_g=jnp.ones((dim,), jnp.float32), ln1_b=jnp.zeros((dim,), jnp.float32),
        qkv_w=_xavier_bf16(ks[0], (dim, 3 * dim)),
        proj_w=_xavier_bf16(ks[1], (dim, dim)), proj_b=jnp.zeros((dim,), jnp.float32),
        ln2_g=jnp.ones((dim,), jnp.float32), ln2_b=jnp.zeros((dim,), jnp.float32),
        fc1_w=_xavier_bf16(ks[2], (dim, hidden)), fc1_b=jnp.zeros((hidden,), jnp.float32),
        fc2_w=_xavier_bf16(ks[3], (hidden, dim)), fc2_b=jnp.zeros((dim,), jnp.float32),
    )


def init_params(key, cfg):
    ps, ts, C = cfg["patch_size"], cfg["tubelet_size"], cfg["in_chans"]
    num_patches = (cfg["T"] // ts) * (cfg["img_size"] // ps) ** 2
    patch_dim = C * ts * ps * ps
    keys = jax.random.split(key, 8 + cfg["enc_depth"] + cfg["dec_depth"])
    ki = iter(range(len(keys)))

    params = dict(
        patch_w=_xavier_bf16(keys[next(ki)], (patch_dim, cfg["enc_dim"])),
        patch_b=jnp.zeros((cfg["enc_dim"],), jnp.float32),
        enc_pos=get_sinusoid_encoding_table(num_patches, cfg["enc_dim"]),
        enc_blocks=[_make_block(keys[next(ki)], cfg["enc_dim"], cfg["mlp_ratio"])
                    for _ in range(cfg["enc_depth"])],
        enc_norm_g=jnp.ones((cfg["enc_dim"],), jnp.float32),
        enc_norm_b=jnp.zeros((cfg["enc_dim"],), jnp.float32),
        enc2dec_w=_xavier_bf16(keys[next(ki)], (cfg["enc_dim"], cfg["dec_dim"])),
        mask_token=(0.02 * jax.random.truncated_normal(
            keys[next(ki)], -1.0, 1.0, (1, 1, cfg["dec_dim"]))).astype(jnp.float32),
        dec_pos=get_sinusoid_encoding_table(num_patches, cfg["dec_dim"]),
        dec_blocks=[_make_block(keys[next(ki)], cfg["dec_dim"], cfg["mlp_ratio"])
                    for _ in range(cfg["dec_depth"])],
        dec_norm_g=jnp.ones((cfg["dec_dim"],), jnp.float32),
        dec_norm_b=jnp.zeros((cfg["dec_dim"],), jnp.float32),
        head_w=_xavier_bf16(keys[next(ki)], (cfg["dec_dim"], cfg["dec_num_classes"])),
        head_b=jnp.zeros((cfg["dec_num_classes"],), jnp.float32),
    )
    return params, num_patches


# ----------------------------------------------------------------------------
# Full forward pass (PretrainVisionTransformer.forward)
# ----------------------------------------------------------------------------
def model_forward(params, cfg, x, mask):
    B = x.shape[0]
    N = mask.shape[1]
    # TODO(synk): visible-token count must be host-static (concrete mask), so the
    # whole forward cannot be jitted with `mask` as a traced argument.
    num_masked = int(np.asarray(mask)[0].sum())
    num_vis = N - num_masked

    # visible/masked ordering identical to torch's x[~mask] / x[mask] row order
    order = jnp.argsort(mask.astype(jnp.int32), axis=1, stable=True)
    vis_idx = order[:, :num_vis]
    msk_idx = order[:, num_vis:]

    # ---------------- encoder ----------------
    tokens = patchify(x, cfg["patch_size"], cfg["tubelet_size"])            # (B,N,pd)
    # gather only visible raw patches BEFORE embedding (identical math, less traffic)
    tok_vis = jnp.take_along_axis(tokens, vis_idx[:, :, None], axis=1)      # (B,Nv,pd)
    enc_pos = jnp.broadcast_to(params["enc_pos"], (B, N, cfg["enc_dim"]))
    pos_vis_enc = jnp.take_along_axis(enc_pos, vis_idx[:, :, None], axis=1)

    # fused: patch embed matmul + bias + positional add
    x_vis = pallas_linear(tok_vis, params["patch_w"], params["patch_b"], add=pos_vis_enc)

    for blk in params["enc_blocks"]:
        x_vis = block_forward(x_vis, blk, cfg["enc_heads"])

    # ---------------- encoder -> decoder ----------------
    Cd = cfg["dec_dim"]
    dec_pos = jnp.broadcast_to(params["dec_pos"], (B, N, Cd))
    pos_vis = jnp.take_along_axis(dec_pos, vis_idx[:, :, None], axis=1)
    pos_msk = jnp.take_along_axis(dec_pos, msk_idx[:, :, None], axis=1)

    # fused: encoder final LayerNorm + encoder_to_decoder (bias=False) + dec pos add
    x_vis_dec = pallas_linear(x_vis, params["enc2dec_w"], None,
                              ln=(params["enc_norm_g"], params["enc_norm_b"]),
                              add=pos_vis)

    x_full = jnp.concatenate([x_vis_dec, params["mask_token"] + pos_msk], axis=1)

    # ---------------- decoder ----------------
    for blk in params["dec_blocks"]:
        x_full = block_forward(x_full, blk, cfg["dec_heads"])

    # return_token_num = num_masked > 0 -> head(norm(x[:, -num_masked:])), fused
    x_tail = x_full[:, -num_masked:]
    out = pallas_linear(x_tail, params["head_w"], params["head_b"],
                        ln=(params["dec_norm_g"], params["dec_norm_b"]))
    return out


# ----------------------------------------------------------------------------
if __name__ == "__main__":
    cfg = dict(
        img_size=16, patch_size=8, T=4, tubelet_size=2, in_chans=3,
        enc_dim=32, enc_depth=2, enc_heads=4,
        dec_dim=16, dec_depth=1, dec_heads=2,
        dec_num_classes=3 * 2 * 8 * 8,   # = in_chans * tubelet * patch * patch
        mlp_ratio=4.0,
    )

    root = jax.random.PRNGKey(0)
    kp, kx = jax.random.split(root)
    params, num_patches = init_params(kp, cfg)

    B = 2
    x = jax.random.normal(kx, (B, cfg["in_chans"], cfg["T"],
                               cfg["img_size"], cfg["img_size"]), jnp.float32)

    # deterministic mask: half the tokens masked per sample
    num_masked = num_patches // 2
    mask_np = np.zeros((B, num_patches), dtype=bool)
    for b in range(B):
        perm = np.random.RandomState(b).permutation(num_patches)[:num_masked]
        mask_np[b, perm] = True
    mask = jnp.asarray(mask_np)

    out = model_forward(params, cfg, x, mask)
    out = jax.block_until_ready(out)
    assert out.shape == (B, num_masked, cfg["dec_num_classes"]), out.shape
    assert np.all(np.isfinite(np.asarray(out)))
    print("KERNEL_OK")
</pallas_src>

<mosaic_0001>
module attributes {stable_mosaic.version = 11 : i64} {
  func.func @_linear_kernel(%arg0: i32, %arg1: i32, %arg2: i32, %arg3: memref<8x128xf32, #tpu.memory_space<vmem>>, %arg4: memref<128x32xbf16, #tpu.memory_space<vmem>>, %arg5: memref<1x32xf32, #tpu.memory_space<vmem>>, %arg6: memref<8x32xf32, #tpu.memory_space<vmem>>, %arg7: memref<8x32xf32, #tpu.memory_space<vmem>>, %arg8: memref<8x32xf32, #tpu.memory_space<vmem>>) attributes {dimension_semantics = [#tpu.dimension_semantics<parallel>, #tpu.dimension_semantics<parallel>, #tpu.dimension_semantics<arbitrary>], iteration_bounds = array<i64: 1, 1, 3>, scalar_prefetch = 0 : i64, scratch_operands = 1 : i64, tpu.core_type = #tpu.core_type<tc>, window_params = [{transform_indices = @transform_0, window_bounds = array<i64: 8, 128>}, {transform_indices = @transform_1, window_bounds = array<i64: 128, 32>}, {transform_indices = @transform_2, window_bounds = array<i64: 1, 32>}, {transform_indices = @transform_3, window_bounds = array<i64: 8, 32>}, {transform_indices = @transform_4, window_bounds = array<i64: 8, 32>}]} {
    %c0_i32 = arith.constant 0 : i32
    %0 = arith.cmpi eq, %arg2, %c0_i32 : i32
    %1 = arith.extui %0 : i1 to i32
    %c0_i32_0 = arith.constant 0 : i32
    %2 = arith.cmpi ne, %1, %c0_i32_0 : i32
    scf.if %2 {
      %cst_9 = arith.constant 0.000000e+00 : f32
      %13 = vector.broadcast %cst_9 : f32 to vector<8x32xf32>
      %c0_10 = arith.constant 0 : index
      %c0_11 = arith.constant 0 : index
      %14 = vector.load %arg8[%c0_10, %c0_11] : memref<8x32xf32, #tpu.memory_space<vmem>>, vector<8x32xf32>
      tpu.vector_store %arg8[%c0_10, %c0_11], %13 {strides = array<i32>} : memref<8x32xf32, #tpu.memory_space<vmem>>, vector<8x32xf32>,
    } else {
    }
    %c0 = arith.constant 0 : index
    %c0_1 = arith.constant 0 : index
    %3 = vector.load %arg3[%c0, %c0_1] : memref<8x128xf32, #tpu.memory_space<vmem>>, vector<8x128xf32>
    %c0_2 = arith.constant 0 : index
    %c0_3 = arith.constant 0 : index
    %4 = vector.load %arg8[%c0_2, %c0_3] : memref<8x32xf32, #tpu.memory_space<vmem>>, vector<8x32xf32>
    %5 = arith.truncf %3 : vector<8x128xf32> to vector<8x128xbf16>
    %c0_4 = arith.constant 0 : index
    %c0_5 = arith.constant 0 : index
    %6 = vector.load %arg4[%c0_4, %c0_5] : memref<128x32xbf16, #tpu.memory_space<vmem>>, vector<128x32xbf16>
    %cst = arith.constant dense<0.000000e+00> : vector<8x32xf32>
    %7 = tpu.matmul %5, %6, %cst {dimension_numbers = #tpu.dot_dimension_numbers<[1], [0], [0], [1], [0, 0, 1, 1], [], []>} : vector<8x128xbf16>, vector<128x32xbf16>, vector<8x32xf32> -> vector<8x32xf32>
    %8 = arith.addf %4, %7 : vector<8x32xf32>
    %c0_6 = arith.constant 0 : index
    %c0_7 = arith.constant 0 : index
    %9 = vector.load %arg8[%c0_6, %c0_7] : memref<8x32xf32, #tpu.memory_space<vmem>>, vector<8x32xf32>
    tpu.vector_store %arg8[%c0_6, %c0_7], %8 {strides = array<i32>} : memref<8x32xf32, #tpu.memory_space<vmem>>, vector<8x32xf32>,
    %c2_i32 = arith.constant 2 : i32
    %10 = arith.cmpi eq, %arg2, %c2_i32 : i32
    %11 = arith.extui %10 : i1 to i32
    %c0_i32_8 = arith.constant 0 : i32
    %12 = arith.cmpi ne, %11, %c0_i32_8 : i32
    scf.if %12 {
      %c0_9 = arith.constant 0 : index
      %c0_10 = arith.constant 0 : index
      %13 = vector.load %arg8[%c0_9, %c0_10] : memref<8x32xf32, #tpu.memory_space<vmem>>, vector<8x32xf32>
      %c0_11 = arith.constant 0 : index
      %c0_12 = arith.constant 0 : index
      %14 = vector.load %arg5[%c0_11, %c0_12] : memref<1x32xf32, #tpu.memory_space<vmem>>, vector<1x32xf32>
      %15 = vector.broadcast %14 : vector<1x32xf32> to vector<8x32xf32>
      %16 = arith.addf %13, %15 : vector<8x32xf32>
      %c0_13 = arith.constant 0 : index
      %c0_14 = arith.constant 0 : index
      %17 = vector.load %arg6[%c0_13, %c0_14] : memref<8x32xf32, #tpu.memory_space<vmem>>, vector<8x32xf32>
      %18 = arith.addf %16, %17 : vector<8x32xf32>
      %c0_15 = arith.constant 0 : index
      %c0_16 = arith.constant 0 : index
      %19 = vector.load %arg7[%c0_15, %c0_16] : memref<8x32xf32, #tpu.memory_space<vmem>>, vector<8x32xf32>
      tpu.vector_store %arg7[%c0_15, %c0_16], %18 {strides = array<i32>} : memref<8x32xf32, #tpu.memory_space<vmem>>, vector<8x32xf32>,
    } else {
    }
    return
  }
  func.func @transform_0(%arg0: i32, %arg1: i32, %arg2: i32) -> (i32, i32) {
    %c0_i32 = arith.constant 0 : i32
    return %arg0, %arg2 : i32, i32
  }
  func.func @transform_1(%arg0: i32, %arg1: i32, %arg2: i32) -> (i32, i32) {
    %c0_i32 = arith.constant 0 : i32
    return %arg2, %arg1 : i32, i32
  }
  func.func @transform_2(%arg0: i32, %arg1: i32, %arg2: i32) -> (i32, i32) {
    %c0_i32 = arith.constant 0 : i32
    %c0_i32_0 = arith.constant 0 : i32
    return %c0_i32, %arg1 : i32, i32
  }
  func.func @transform_3(%arg0: i32, %arg1: i32, %arg2: i32) -> (i32, i32) {
    %c0_i32 = arith.constant 0 : i32
    return %arg0, %arg1 : i32, i32
  }
  func.func @transform_4(%arg0: i32, %arg1: i32, %arg2: i32) -> (i32, i32) {
    %c0_i32 = arith.constant 0 : i32
    return %arg0, %arg1 : i32, i32
  }
}

</mosaic_0001>

<llo_original>
// kernel: tpu_custom_call.1
$region0: #{tpu_custom_call.1}
  #allocation0 [shape = 'u32[]', space=smem, size = 0x4, offset = 0x4, fixed_abs, tag = 'smem constant byte address 0x4 - core index']
  #allocation1 [shape = 'u32[144,128]{1,0:T(1,128)}', space=vmem, size = 0x12000, scoped, tag = 'internal scratch']
  #allocation2 [shape = 'f32[8,32]{1,0:T(8,128)}', space=vmem, size = 0x1000, scoped, tag = 'scratch operand']
  %s0 = inlined_call_operand.vmem [shape: f32[8,384], index: 0, kind: input, shape index: {}]
  %s1 = inlined_call_operand.vmem [shape: bf16[384,32], index: 1, kind: input, shape index: {}]
  %s2 = inlined_call_operand.vmem [shape: f32[1,32], index: 2, kind: input, shape index: {}]
  %s3 = inlined_call_operand.vmem [shape: f32[8,32], index: 3, kind: input, shape index: {}]
  %s4 = inlined_call_operand.hbm [shape: f32[8,32], index: 4, kind: output, shape index: {}]
  %s5 = sld [smem:[#allocation0]]
  $region57: #{tpu_custom_call.1} parent=0
    _
  %s7 = ssub.s32 1, %s5
  %s8 = scalar_select 0, %s7, %s5
  $region1: #{tpu_custom_call.1} parent=0
    #allocation3 [shape = 'u8[4096]{0}', space=vmem, size = 0x1000, scoped, tag = 'output window, operand 0, single buffered']
    #allocation4 [shape = 's32[2]{0}', space=sflag, size = 0x8, scoped, tag = 'scoped memory for tpu_custom_call.1']
    %9 = vsyncpa [#allocation4], 0
    loop: start=0, step=1, limit=5
    $region2: #{tpu_custom_call.1} parent=1 // loop_pre_header
      _
    $region3: #{tpu_custom_call.1} parent=1 // loop_header
      %s11 = sphi 0, %s15
      %p12 = scmp.ge.s32.totalorder %s11, 5
      %s18 = sphi 0, %s37
      %s19 = sphi 0, %s33
      %s20 = sphi 0, %s29
      %s21 = sphi 0, %s18
      %s22 = sphi 0, %s19
      %s23 = sphi 0, %s20
      %s24 = sphi 0, %s21
      %s25 = sphi 0, %s22
      %s26 = sphi 0, %s23
      %s42 = sphi 0, %s44
      %s45 = sphi 0, %s42
      %s46 = sphi 0, %s45
      %s62 = sphi 0, %s46
      %s70 = sphi 0, %s72
      %s73 = sphi 0, %s70
      %s74 = sphi 0, %s73
      %s90 = sphi 0, %s74
      %s96 = sphi 0, %s98
      %s99 = sphi 0, %s96
      %s100 = sphi 0, %s99
      %s116 = sphi 0, %s100
      %s124 = sphi 0, %s126
      %s127 = sphi 0, %s124
      %s128 = sphi 0, %s127
      %s144 = sphi 0, %s128
      %s152 = sphi 0, %s154
      %s155 = sphi 0, %s152
      %s156 = sphi 0, %s155
      %s172 = sphi 0, %s156
    $region4: #{tpu_custom_call.1} parent=1 // loop_header_branch
      %14 = sbr.rel (%p12) target = $region8
    $region5: #{tpu_custom_call.1} parent=1 // loop_body
      %s16 = ssub.s32 %s11, 1
      %s17 = ssub.s32 %s11, 2
      %s27 = sadd.s32 1, %s20
      %p28 = scmp.ge.s32.totalorder %s27, 3
      %s29 = scalar_select %p28, 0, %s27
      %s30 = sadd.s32 1, %s19
      %s31 = scalar_select %p28, %s30, %s19
      %p32 = scmp.ge.s32.totalorder %s31, 1
      %s33 = scalar_select %p32, 0, %s31
      %s34 = sadd.s32 1, %s18
      %s35 = scalar_select %p32, %s34, %s18
      %p36 = scmp.ge.s32.totalorder %s35, 1
      %s37 = scalar_select %p36, 0, %s35
      %s38 = ssub.s32 %s18, %s37
      %s39 = ssub.s32 %s20, %s29
      %s40 = sor.u32 %s38, %s39
      %p41 = scmp.eq.s32.totalorder %s40, 0
      %s43 = sadd.s32 %s42, 1
      %s44 = scalar_select %p41, %s42, %s43
      %p47 = pneg %p41
      %p48 = scmp.eq.s32.totalorder %s11, 2
      %p49 = por %p47, %p48
      %p50 = scmp.ne.s32.totalorder %s42, %s45
      %p51 = scmp.eq.s32.totalorder %s11, 0
      %p52 = por %p50, %p51
      %p53 = scmp.ne.s32.totalorder %s42, %s45
      %p54 = scmp.eq.s32.totalorder %s16, 2
      %p55 = por %p53, %p54
      %p56 = scmp.ne.s32.totalorder %s45, %s46
      %p57 = scmp.eq.s32.totalorder %s16, 0
      %p58 = por %p56, %p57
      %p59 = scmp.ne.s32.totalorder %s45, %s46
      %p60 = scmp.eq.s32.totalorder %s17, 2
      %p61 = por %p59, %p60
      %p63 = scmp.ne.s32.totalorder %s46, %s62
      %p64 = scmp.eq.s32.totalorder %s17, 0
      %p65 = por %p63, %p64
      %s66 = ssub.s32 %s20, %s29
      %s67 = ssub.s32 %s19, %s33
      %s68 = sor.u32 %s66, %s67
      %p69 = scmp.eq.s32.totalorder %s68, 0
      %s71 = sadd.s32 %s70, 1
      %s72 = scalar_select %p69, %s70, %s71
      %p75 = pneg %p69
      %p76 = scmp.eq.s32.totalorder %s11, 2
      %p77 = por %p75, %p76
      %p78 = scmp.ne.s32.totalorder %s70, %s73
      %p79 = scmp.eq.s32.totalorder %s11, 0
      %p80 = por %p78, %p79
      %p81 = scmp.ne.s32.totalorder %s70, %s73
      %p82 = scmp.eq.s32.totalorder %s16, 2
      %p83 = por %p81, %p82
      %p84 = scmp.ne.s32.totalorder %s73, %s74
      %p85 = scmp.eq.s32.totalorder %s16, 0
      %p86 = por %p84, %p85
      %p87 = scmp.ne.s32.totalorder %s73, %s74
      %p88 = scmp.eq.s32.totalorder %s17, 2
      %p89 = por %p87, %p88
      %p91 = scmp.ne.s32.totalorder %s74, %s90
      %p92 = scmp.eq.s32.totalorder %s17, 0
      %p93 = por %p91, %p92
      %s94 = ssub.s32 %s19, %s33
      %p95 = scmp.eq.s32.totalorder %s94, 0
      %s97 = sadd.s32 %s96, 1
      %s98 = scalar_select %p95, %s96, %s97
      %p101 = pneg %p95
      %p102 = scmp.eq.s32.totalorder %s11, 2
      %p103 = por %p101, %p102
      %p104 = scmp.ne.s32.totalorder %s96, %s99
      %p105 = scmp.eq.s32.totalorder %s11, 0
      %p106 = por %p104, %p105
      %p107 = scmp.ne.s32.totalorder %s96, %s99
      %p108 = scmp.eq.s32.totalorder %s16, 2
      %p109 = por %p107, %p108
      %p110 = scmp.ne.s32.totalorder %s99, %s100
      %p111 = scmp.eq.s32.totalorder %s16, 0
      %p112 = por %p110, %p111
      %p113 = scmp.ne.s32.totalorder %s99, %s100
      %p114 = scmp.eq.s32.totalorder %s17, 2
      %p115 = por %p113, %p114
      %p117 = scmp.ne.s32.totalorder %s100, %s116
      %p118 = scmp.eq.s32.totalorder %s17, 0
      %p119 = por %p117, %p118
      %s120 = ssub.s32 %s18, %s37
      %s121 = ssub.s32 %s19, %s33
      %s122 = sor.u32 %s120, %s121
      %p123 = scmp.eq.s32.totalorder %s122, 0
      %s125 = sadd.s32 %s124, 1
      %s126 = scalar_select %p123, %s124, %s125
      %p129 = pneg %p123
      %p130 = scmp.eq.s32.totalorder %s11, 2
      %p131 = por %p129, %p130
      %p132 = scmp.ne.s32.totalorder %s124, %s127
      %p133 = scmp.eq.s32.totalorder %s11, 0
      %p134 = por %p132, %p133
      %p135 = scmp.ne.s32.totalorder %s124, %s127
      %p136 = scmp.eq.s32.totalorder %s16, 2
      %p137 = por %p135, %p136
      %p138 = scmp.ne.s32.totalorder %s127, %s128
      %p139 = scmp.eq.s32.totalorder %s16, 0
      %p140 = por %p138, %p139
      %p141 = scmp.ne.s32.totalorder %s127, %s128
      %p142 = scmp.eq.s32.totalorder %s17, 2
      %p143 = por %p141, %p142
      %p145 = scmp.ne.s32.totalorder %s128, %s144
      %p146 = scmp.eq.s32.totalorder %s17, 0
      %p147 = por %p145, %p146
      %s148 = ssub.s32 %s18, %s37
      %s149 = ssub.s32 %s19, %s33
      %s150 = sor.u32 %s148, %s149
      %p151 = scmp.eq.s32.totalorder %s150, 0
      %s153 = sadd.s32 %s152, 1
      %s154 = scalar_select %p151, %s152, %s153
      %p157 = pneg %p151
      %p158 = scmp.eq.s32.totalorder %s11, 2
      %p159 = por %p157, %p158
      %p160 = scmp.ne.s32.totalorder %s152, %s155
      %p161 = scmp.eq.s32.totalorder %s11, 0
      %p162 = por %p160, %p161
      %p163 = scmp.ne.s32.totalorder %s152, %s155
      %p164 = scmp.eq.s32.totalorder %s16, 2
      %p165 = por %p163, %p164
      %p166 = scmp.ne.s32.totalorder %s155, %s156
      %p167 = scmp.eq.s32.totalorder %s16, 0
      %p168 = por %p166, %p167
      %p169 = scmp.ne.s32.totalorder %s155, %s156
      %p170 = scmp.eq.s32.totalorder %s17, 2
      %p171 = por %p169, %p170
      %p173 = scmp.ne.s32.totalorder %s156, %s172
      %p174 = scmp.eq.s32.totalorder %s17, 0
      %p175 = por %p173, %p174
      %p176 = scmp.le.s32.totalorder 1, %s11
      %p177 = scmp.lt.s32.totalorder %s11, 4
      %p178 = pnand %p176, %p177
      %p179 = pneg %p178
      // Predicated region
      $region9: #{tpu_custom_call.1} parent=5 // pred_check
        _
      $region10: #{tpu_custom_call.1} parent=5 // pred_check_branch
        %181 = sbr.rel (%p178) target = $region12
      $region11: #{tpu_custom_call.1} parent=5 // pred_region
        %s182 = ssub.s32 %s11, 1
        // Predicated region
        $region13: #{tpu_custom_call.1} parent=11 // pred_check
          %p183 = pneg %p112
        $region14: #{tpu_custom_call.1} parent=11 // pred_check_branch
          %185 = sbr.rel (%p183) target = $region16
        $region15: #{tpu_custom_call.1} parent=11 // pred_region
          %p186 = scmp.lt.s32.totalorder %s22, 0
          %s187 = scalar_select %p186, %s22, 0
          %s188 = scalar_lea.vmem %s2, %s187
        $region16: #{tpu_custom_call.1} parent=11 // pred_fallthru
          _
        // Predicated region
        $region17: #{tpu_custom_call.1} parent=11 // pred_check
          %p189 = pneg %p140
        $region18: #{tpu_custom_call.1} parent=11 // pred_check_branch
          %191 = sbr.rel (%p189) target = $region20
        $region19: #{tpu_custom_call.1} parent=11 // pred_region
          %p192 = scmp.lt.s32.totalorder %s21, 0
          %s193 = scalar_select %p192, %s21, 0
          %p194 = scmp.lt.s32.totalorder %s22, 0
          %s195 = scalar_select %p194, %s22, 0
          %s196 = sadd.s32 %s195, %s193
          %s197 = smul.addr %s196, 8
          %s198 = scalar_lea.vmem %s3, %s197
        $region20: #{tpu_custom_call.1} parent=11 // pred_fallthru
          _
      $region12: #{tpu_custom_call.1} parent=5 // pred_fallthru
        _
      %p199 = scmp.lt.s32.totalorder %s11, 3
      // Predicated region
      $region21: #{tpu_custom_call.1} parent=5 // pred_check
        %p200 = pneg %p199
      $region22: #{tpu_custom_call.1} parent=5 // pred_check_branch
        %202 = sbr.rel (%p200) target = $region24
      $region23: #{tpu_custom_call.1} parent=5 // pred_region
        // Predicated region
        $region25: #{tpu_custom_call.1} parent=23 // pred_check
          %p203 = pneg %p52
        $region26: #{tpu_custom_call.1} parent=23 // pred_check_branch
          %205 = sbr.rel (%p203) target = $region28
        $region27: #{tpu_custom_call.1} parent=23 // pred_region
          %p206 = scmp.lt.s32.totalorder %s18, 0
          %s207 = scalar_select %p206, %s18, 0
          %p208 = scmp.lt.s32.totalorder %s20, 2
          %s209 = scalar_select %p208, %s20, 2
          %s210 = smul.addr %s207, 3
          %s211 = sadd.s32 %s209, %s210
          %s212 = smul.addr %s211, 8
          %s213 = scalar_lea.vmem %s0, %s212
        $region28: #{tpu_custom_call.1} parent=23 // pred_fallthru
          _
        // Predicated region
        $region29: #{tpu_custom_call.1} parent=23 // pred_check
          %p214 = pneg %p80
        $region30: #{tpu_custom_call.1} parent=23 // pred_check_branch
          %216 = sbr.rel (%p214) target = $region32
        $region31: #{tpu_custom_call.1} parent=23 // pred_region
          %s217 = smul.u32 16, %s20
          %p218 = scmp.lt.s32.totalorder %s217, 47
          %s219 = scalar_select %p218, %s217, 47
          %p220 = scmp.lt.s32.totalorder %s19, 0
          %s221 = scalar_select %p220, %s19, 0
          %s222 = sadd.s32 %s221, %s219
          %s223 = smul.addr %s222, 4
          %s224 = scalar_lea.vmem %s1, %s223
          %s225 = smul.u32 16, %s20
        $region32: #{tpu_custom_call.1} parent=23 // pred_fallthru
          _
      $region24: #{tpu_custom_call.1} parent=5 // pred_fallthru
        _
      %p226 = scmp.le.s32.totalorder 1, %s11
      %p227 = scmp.lt.s32.totalorder %s11, 4
      %p228 = pnand %p226, %p227
      %p229 = pneg %p228
      // Predicated region
      $region33: #{tpu_custom_call.1} parent=5 // pred_check
        _
      $region34: #{tpu_custom_call.1} parent=5 // pred_check_branch
        %231 = sbr.rel (%p228) target = $region36
      $region35: #{tpu_custom_call.1} parent=5 // pred_region
        %s232 = ssub.s32 %s11, 1
        %p233 = scmp.lt.s32.totalorder %s21, 0
        %s234 = scalar_select %p233, %s21, 0
        %p235 = scmp.lt.s32.totalorder %s23, 2
        %s236 = scalar_select %p235, %s23, 2
        %s237 = smul.addr %s234, 3
        %s238 = sadd.s32 %s236, %s237
        %s239 = smul.addr %s238, 8
        %s240 = scalar_lea.vmem %s0, %s239
        %p241 = pneg %p58
        %p242 = pneg %p55
        %s243 = smul.u32 16, %s23
        %p244 = scmp.lt.s32.totalorder %s243, 47
        %s245 = scalar_select %p244, %s243, 47
        %p246 = scmp.lt.s32.totalorder %s22, 0
        %s247 = scalar_select %p246, %s22, 0
        %s248 = sadd.s32 %s247, %s245
        %s249 = smul.addr %s248, 4
        %s250 = scalar_lea.vmem %s1, %s249
        %p251 = pneg %p86
        %p252 = pneg %p83
        %p253 = scmp.lt.s32.totalorder %s22, 0
        %s254 = scalar_select %p253, %s22, 0
        %s255 = scalar_lea.vmem %s2, %s254
        %p256 = pneg %p112
        %p257 = pneg %p109
        %p258 = scmp.lt.s32.totalorder %s21, 0
        %s259 = scalar_select %p258, %s21, 0
        %p260 = scmp.lt.s32.totalorder %s22, 0
        %s261 = scalar_select %p260, %s22, 0
        %s262 = sadd.s32 %s261, %s259
        %s263 = smul.addr %s262, 8
        %s264 = scalar_lea.vmem %s3, %s263
        %p265 = pneg %p140
        %p266 = pneg %p137
        %p267 = pneg %p168
        %p268 = pneg %p165
        %p269 = scmp.lt.s32.totalorder %s21, 0
        %s270 = scalar_select %p269, %s21, 0
        %p271 = scmp.lt.s32.totalorder %s23, 2
        %s272 = scalar_select %p271, %s23, 2
        %s273 = smul.addr %s270, 3
        %s274 = sadd.s32 %s272, %s273
        %s275 = smul.addr %s274, 8
        %s276 = scalar_lea.vmem %s0, %s275
        %s277 = smul.u32 16, %s23
        %p278 = scmp.lt.s32.totalorder %s277, 47
        %s279 = scalar_select %p278, %s277, 47
        %p280 = scmp.lt.s32.totalorder %s22, 0
        %s281 = scalar_select %p280, %s22, 0
        %s282 = sadd.s32 %s281, %s279
        %s283 = smul.addr %s282, 4
        %s284 = scalar_lea.vmem %s1, %s283
        %s285 = smul.u32 16, %s23
        %p286 = scmp.lt.s32.totalorder %s22, 0
        %s287 = scalar_select %p286, %s22, 0
        %s288 = scalar_lea.vmem %s2, %s287
        %p289 = scmp.lt.s32.totalorder %s21, 0
        %s290 = scalar_select %p289, %s21, 0
        %p291 = scmp.lt.s32.totalorder %s22, 0
        %s292 = scalar_select %p291, %s22, 0
        %s293 = sadd.s32 %s292, %s290
        %s294 = smul.addr %s293, 8
        %s295 = scalar_lea.vmem %s3, %s294
        %p297 = scmp.eq.s32.totalorder %s23, 0
        // Predicated region
        $region37: #{tpu_custom_call.1} parent=35 // pred_check
          %p298 = pneg %p297
        $region38: #{tpu_custom_call.1} parent=35 // pred_check_branch
          %300 = sbr.rel (%p298) target = $region40
        $region39: #{tpu_custom_call.1} parent=35 // pred_region
          %vm301 = vcmask 261120
          %302 = vst.msk [vmem:[#allocation2] sm:$0xff] %vm301, 0.0
        $region40: #{tpu_custom_call.1} parent=35 // pred_fallthru
          _
        %v303 = vld [vmem:[%s276] sm:$0xff]
        %v304 = vld [vmem:[#allocation2] sm:$0xff]
        %v305 = vpack.c.bf16 %v303, %v303
        %v306 = vld [vmem:[%s284] sm:$0xf]
        %v307 = vld [vmem:[%s284 + $0x4] sm:$0xf]
        %v308 = vld [vmem:[%s284 + $0x8] sm:$0xf]
        %v309 = vld [vmem:[%s284 + $0xc] sm:$0xf]
        %v310 = vld [vmem:[%s284 + $0x10] sm:$0xf]
        %v311 = vld [vmem:[%s284 + $0x14] sm:$0xf]
        %v312 = vld [vmem:[%s284 + $0x18] sm:$0xf]
        %v313 = vld [vmem:[%s284 + $0x1c] sm:$0xf]
        %v314 = vld [vmem:[%s284 + $0x20] sm:$0xf]
        %v315 = vld [vmem:[%s284 + $0x24] sm:$0xf]
        %v316 = vld [vmem:[%s284 + $0x28] sm:$0xf]
        %v317 = vld [vmem:[%s284 + $0x2c] sm:$0xf]
        %v318 = vld [vmem:[%s284 + $0x30] sm:$0xf]
        %v319 = vld [vmem:[%s284 + $0x34] sm:$0xf]
        %v320 = vld [vmem:[%s284 + $0x38] sm:$0xf]
        %v321 = vld [vmem:[%s284 + $0x3c] sm:$0xf]
        %v338 = vunpack.c.l.b16 %v306
        %v339 = vunpack.c.l.b16 %v307
        %v340 = vunpack.c.l.b16 %v308
        %v341 = vunpack.c.l.b16 %v309
        %v342 = vunpack.c.l.b16 %v310
        %v343 = vunpack.c.l.b16 %v311
        %v344 = vunpack.c.l.b16 %v312
        %v345 = vunpack.c.l.b16 %v313
        %v346 = vunpack.c.l.b16 %v314
        %v347 = vunpack.c.l.b16 %v315
        %v348 = vunpack.c.l.b16 %v316
        %v349 = vunpack.c.l.b16 %v317
        %v350 = vunpack.c.l.b16 %v318
        %v351 = vunpack.c.l.b16 %v319
        %v352 = vunpack.c.l.b16 %v320
        %v353 = vunpack.c.l.b16 %v321
        %v354 = vpack.c.b16 %v339, %v338
        %v355 = vpack.c.b16 %v341, %v340
        %v356 = vpack.c.b16 %v343, %v342
        %v357 = vpack.c.b16 %v345, %v344
        %v358 = vpack.c.b16 %v347, %v346
        %v359 = vpack.c.b16 %v349, %v348
        %v360 = vpack.c.b16 %v351, %v350
        %v361 = vpack.c.b16 %v353, %v352
        %370 = vmatprep.subr.bf16.mxu0 0
        %371 = vmatpush1.bf16.msra.mxu0 %v354
        %372 = vmatprep.subr.bf16.mxu0 0
        %373 = vmatpush1.bf16.msra.mxu0 %v355
        %374 = vmatprep.subr.bf16.mxu0 0
        %375 = vmatpush1.bf16.msra.mxu0 %v356
        %376 = vmatprep.subr.bf16.mxu0 0
        %377 = vmatpush1.bf16.msra.mxu0 %v357
        %378 = vmatprep.subr.bf16.mxu0 0
        %379 = vmatpush1.bf16.msra.mxu0 %v358
        %380 = vmatprep.subr.bf16.mxu0 0
        %381 = vmatpush1.bf16.msra.mxu0 %v359
        %382 = vmatprep.subr.bf16.mxu0 0
        %383 = vmatpush1.bf16.msra.mxu0 %v360
        %384 = vmatprep.subr.bf16.mxu0 0
        %385 = vmatpush1.bf16.msra.mxu0 %v361
        %386 = vmatprep.subr.bf16.mxu0 0
        %387 = vmatpush1.bf16.msra.mxu0 0
        %388 = vmatprep.subr.bf16.mxu0 0
        %389 = vmatpush1.bf16.msra.mxu0 0
        %390 = vmatprep.subr.bf16.mxu0 0
        %391 = vmatpush1.bf16.msra.mxu0 0
        %392 = vmatprep.subr.bf16.mxu0 0
        %393 = vmatpush1.bf16.msra.mxu0 0
        %394 = vmatprep.subr.bf16.mxu0 0
        %395 = vmatpush1.bf16.msra.mxu0 0
        %396 = vmatprep.subr.bf16.mxu0 0
        %397 = vmatpush1.bf16.msra.mxu0 0
        %398 = vmatprep.subr.bf16.mxu0 0
        %399 = vmatpush1.bf16.msra.mxu0 0
        %400 = vmatprep.subr.bf16.mxu0 0
        %401 = vmatpush1.bf16.msra.mxu0 0
        %402 = vmatprep.mubr.bf16.mxu0 0
        %403 = vmatmul.mubr.bf16.gmra.mrb[0].mxu0 %v305
        %v404 = vpop.f32.mrb[0].mxu0
        %v405 = vadd.f32 0.0, %v404
        %v406 = vpop.f32.mrb[0].mxu0
        %v407 = vpop.f32.mrb[0].mxu0
        %v408 = vpop.f32.mrb[0].mxu0
        %409 = vdwg.mxu0
        %v410 = vadd.f32 %v304, %v405
        %vm411 = vcmask 261120
        %412 = vst.msk [vmem:[#allocation2] sm:$0xff] %vm411, %v410
        %p413 = scmp.eq.s32.totalorder %s23, 2
        // Predicated region
        $region41: #{tpu_custom_call.1} parent=35 // pred_check
          %p414 = pneg %p413
        $region42: #{tpu_custom_call.1} parent=35 // pred_check_branch
          %416 = sbr.rel (%p414) target = $region44
        $region43: #{tpu_custom_call.1} parent=35 // pred_region
          %v417 = vld [vmem:[#allocation2] sm:$0xff]
          %v418 = vld [vmem:[%s288] sm:$0x1]
          %v420 = vlaneseq
          %v421 = vshrl.u32 %v420, 7
          %v422 = vsub.s32 0, %v421
          %v423 = vrot.slane %v418, %v422
          %v425 = vadd.f32 %v417, %v423
          %v426 = vld [vmem:[%s295] sm:$0xff]
          %v427 = vadd.f32 %v425, %v426
          %428 = vst.msk [vmem:[#allocation3] sm:$0xff] %vm411, %v427
        $region44: #{tpu_custom_call.1} parent=35 // pred_fallthru
          _
        // Predicated region
        $region45: #{tpu_custom_call.1} parent=35 // pred_check
          %p429 = pneg %p165
        $region46: #{tpu_custom_call.1} parent=35 // pred_check_branch
          %431 = sbr.rel (%p429) target = $region48
        $region47: #{tpu_custom_call.1} parent=35 // pred_region
          %s433 = ssub.s32 128, 128
          %434 = vsyncadd [#allocation4], %s433
          %s435 = sadd.s32 %s22, %s21
          %s436 = smul.addr %s435, 128
          %s437 = scalar_lea.hbm %s4, %s436
          %s439 = sshll.u32 [#allocation3], 4
          %s440 = int_to_ptr.vmem [resolvable:$true] %s439
          %442 = dma.vmem_to_hbm [thread:$0]  %s440, 128, %s437, [#allocation4]
        $region48: #{tpu_custom_call.1} parent=35 // pred_fallthru
          _
        // Predicated region
        $region49: #{tpu_custom_call.1} parent=35 // pred_check
          %p443 = pneg %p165
        $region50: #{tpu_custom_call.1} parent=35 // pred_check_branch
          %445 = sbr.rel (%p443) target = $region52
        $region51: #{tpu_custom_call.1} parent=35 // pred_region
          %446 = dma.done [#allocation4], 128
        $region52: #{tpu_custom_call.1} parent=35 // pred_fallthru
          _
      $region36: #{tpu_custom_call.1} parent=5 // pred_fallthru
        _
      %p447 = scmp.le.s32.totalorder 2, %s11
      // Predicated region
      $region53: #{tpu_custom_call.1} parent=5 // pred_check
        %p448 = pneg %p447
      $region54: #{tpu_custom_call.1} parent=5 // pred_check_branch
        %450 = sbr.rel (%p448) target = $region56
      $region55: #{tpu_custom_call.1} parent=5 // pred_region
        %s451 = ssub.s32 %s11, 2
      $region56: #{tpu_custom_call.1} parent=5 // pred_fallthru
        _
    $region6: #{tpu_custom_call.1} parent=1 // loop_footer
      %s15 = sadd.s32 1, %s11
    $region7: #{tpu_custom_call.1} parent=1 // loop_footer_branch
      %10 = sbr.rel target = $region3
    $region8: #{tpu_custom_call.1} parent=1 // loop_exit
      _
    %452 = vsyncpa [#allocation4], 1
    %s453 = scalar_lea.sflag [#allocation4], 1
    %454 = vsyncpa %s453, 1

</llo_original>
